<compile_context>
chip_gen: v5e
topology: v5e:2x2
jax: 0.10.0
libtpu: 0.0.40
codegen_flags: <defaults>
</compile_context>

<pallas_src>
import jax
import jax.numpy as jnp
from jax.experimental import pallas as pl
from jax.experimental.pallas import tpu as pltpu

TAU = 2.0          # LIFNode default tau
V_TH = 1.0         # LIFNode default v_threshold
BN_EPS = 1e-5
SPIKE_TH = TAU * V_TH   # spike iff pre-activation >= tau * v_th (v starts at 0)


def _fold_bn(bn):
    scale = bn["gamma"] / jnp.sqrt(bn["var"] + BN_EPS)
    bias = bn["beta"] - bn["mean"] * scale
    return scale, bias


def _banded_weights(w_hwio, bn_scale, W):
    """(3,3,Ci,Co) conv weights (BN scale folded along Co) -> (3*W*Ci, W*Co).

    K axis = [dy=0 | dy=1 | dy=2] blocks of an UNPADDED image row (W*Ci each);
    the horizontal zero padding is baked in by zeroing out-of-range taps, so
    K is exactly 3*W*Ci (no +2 halo) and every matmul operand is lane aligned.
    """
    _, _, Ci, Co = w_hwio.shape
    w = w_hwio * bn_scale                       # fold BN scale into weights

    k_idx = jnp.arange(W * Ci)
    n_idx = jnp.arange(W * Co)
    kw = k_idx // Ci                            # input-W position of K element
    ci = k_idx % Ci
    wpos = n_idx // Co                          # output-W position of N element
    co = n_idx % Co
    dx = kw[:, None] - wpos[None, :] + 1        # (K, N) conv tap index
    valid = (dx >= 0) & (dx <= 2)               # taps outside [0,2] -> zero pad
    dx_c = jnp.clip(dx, 0, 2)

    def per_dy(w_dy):                           # w_dy: (3, Ci, Co)
        g = w_dy[dx_c, ci[:, None], co[None, :]]          # (K, N)
        return jnp.where(valid, g, jnp.zeros_like(g))

    bands = jax.vmap(per_dy)(w)                 # (3, W*Ci, W*Co)
    return bands.reshape(3 * W * Ci, W * Co)


def _make_fused_block_kernel(H, W, C, Bt, cnf):
    """conv3x3+BN+LIF -> conv3x3+BN+LIF -> sew residual for Bt images."""
    WC = W * C

    def _im2row(dst, src_bf16):
        """Build the (Bt*H, 3*WC) im2row LHS in VMEM from (Bt*H, WC) rows.
        Column block d holds input row h+d-1 (zeros at the vertical edges)."""
        zrow = jnp.zeros((1, WC), jnp.bfloat16)
        for b in range(Bt):
            seg = b * H
            rows = src_bf16[seg:seg + H]
            # dy = 0 block: row above (zero for h = 0)
            dst[seg:seg + 1, 0:WC] = zrow
            dst[seg + 1:seg + H, 0:WC] = rows[0:H - 1]
            # dy = 1 block: same row
            dst[seg:seg + H, WC:2 * WC] = rows
            # dy = 2 block: row below (zero for h = H-1)
            dst[seg:seg + H - 1, 2 * WC:3 * WC] = rows[1:H]
            dst[seg + H - 1:seg + H, 2 * WC:3 * WC] = zrow

    def kernel(x_ref, w1_ref, t1_ref, w2_ref, t2_ref, out_ref, l1, l2):
        ident = x_ref[...]                                   # (Bt*H, WC) f32

        # -------- stage 1: conv1 (one K=3*WC matmul) + BN1 + LIF1 ----------
        _im2row(l1, ident.astype(jnp.bfloat16))
        acc1 = jnp.dot(l1[...], w1_ref[...],
                       preferred_element_type=jnp.float32)   # (Bt*H, WC)
        s1 = (acc1 >= t1_ref[...]).astype(jnp.bfloat16)      # spikes, exact in bf16

        # -------- stage 2: conv2 (one K=3*WC matmul) + BN2 + LIF2 ----------
        _im2row(l2, s1)
        acc2 = jnp.dot(l2[...], w2_ref[...],
                       preferred_element_type=jnp.float32)
        s2 = (acc2 >= t2_ref[...]).astype(jnp.float32)

        # -------- sew_function(out, identity, cnf) -------------------------
        if cnf == "ADD":
            res = s2 + ident
        elif cnf == "AND":
            res = s2 * ident
        else:  # "OR"
            res = s2 + ident - s2 * ident
        out_ref[...] = res

    return kernel


def basic_block_forward(x_nchw, params, cnf="ADD", images_per_step=None):
    """BasicBlock.forward (stride=1, downsample=None, groups=1)."""
    if cnf not in ("ADD", "AND", "OR"):
        raise NotImplementedError(cnf)

    x = jnp.transpose(x_nchw, (0, 2, 3, 1)).astype(jnp.float32)   # NCHW -> NHWC
    B, H, W, C = x.shape
    assert params["w1"].shape == (3, 3, C, C), "downsample=None needs in_planes == planes"
    WC = W * C
    assert WC % 128 == 0, "lane-dense layout needs W*C to be a multiple of 128"

    # Images stacked along matmul-M per grid step; keep >= 2 parallel steps
    # when B >= 2 so both v7x TensorCores get work (bigger M amortizes the
    # per-step overhead on v5e/v6e for larger batches).
    if images_per_step is None:
        images_per_step = B // 2 if (B >= 2 and B % 2 == 0) else 1
    Bt = images_per_step
    assert B % Bt == 0
    n_steps = B // Bt

    s1, b1 = _fold_bn(params["bn1"])
    s2, b2 = _fold_bn(params["bn2"])
    w1b = _banded_weights(params["w1"], s1, W).astype(jnp.bfloat16)   # (3*WC, WC)
    w2b = _banded_weights(params["w2"], s2, W).astype(jnp.bfloat16)
    # BN bias folded into the spike threshold (channel varies fastest in N).
    t1 = jnp.tile(SPIKE_TH - b1, W).reshape(1, WC).astype(jnp.float32)
    t2 = jnp.tile(SPIKE_TH - b2, W).reshape(1, WC).astype(jnp.float32)

    x_flat = x.reshape(B * H, WC)               # lane-dense, images contiguous in rows

    kernel = _make_fused_block_kernel(H, W, C, Bt, cnf)
    out_flat = pl.pallas_call(
        kernel,
        out_shape=jax.ShapeDtypeStruct((B * H, WC), jnp.float32),
        grid=(n_steps,),
        in_specs=[
            pl.BlockSpec((Bt * H, WC), lambda b: (b, 0)),        # x rows (per step)
            pl.BlockSpec((3 * WC, WC), lambda b: (0, 0)),        # banded w1 (resident)
            pl.BlockSpec((1, WC), lambda b: (0, 0)),             # thr1 (resident)
            pl.BlockSpec((3 * WC, WC), lambda b: (0, 0)),        # banded w2 (resident)
            pl.BlockSpec((1, WC), lambda b: (0, 0)),             # thr2 (resident)
        ],
        out_specs=pl.BlockSpec((Bt * H, WC), lambda b: (b, 0)),
        scratch_shapes=[
            pltpu.VMEM((Bt * H, 3 * WC), jnp.bfloat16),          # im2row stage 1
            pltpu.VMEM((Bt * H, 3 * WC), jnp.bfloat16),          # im2row stage 2
        ],
        compiler_params=pltpu.CompilerParams(
            dimension_semantics=("parallel",)),
    )(x_flat, w1b, t1, w2b, t2)

    out = out_flat.reshape(B, H, W, C)
    return jnp.transpose(out, (0, 3, 1, 2))                      # NHWC -> NCHW


# ---- plain-JAX reference (mirrors the kernel's bf16-operand numerics) -------
def _ref_forward(x_nchw, params, cnf="ADD"):
    x = jnp.transpose(x_nchw, (0, 2, 3, 1)).astype(jnp.float32)

    def stage(inp, w, bn):
        scale, bias = _fold_bn(bn)
        w_eff = (w * scale).astype(jnp.bfloat16)        # same fold + cast as kernel
        y = jax.lax.conv_general_dilated(
            inp.astype(jnp.bfloat16), w_eff,
            window_strides=(1, 1), padding=((1, 1), (1, 1)),
            dimension_numbers=("NHWC", "HWIO", "NHWC"),
            preferred_element_type=jnp.float32) + bias
        return (y >= SPIKE_TH).astype(jnp.float32)

    sp1 = stage(x, params["w1"], params["bn1"])
    sp2 = stage(sp1, params["w2"], params["bn2"])
    if cnf == "ADD":
        out = sp2 + x
    elif cnf == "AND":
        out = sp2 * x
    else:
        out = sp2 + x - sp2 * x
    return jnp.transpose(out, (0, 3, 1, 2))


if __name__ == "__main__":
    B, C, H, W = 2, 8, 16, 16          # in_planes == planes (downsample=None); W*C = 128
    key = jax.random.PRNGKey(0)
    kx, kw1, kw2, kg1, kb1, km1, kv1, kg2, kb2, km2, kv2 = jax.random.split(key, 11)

    x = 2.5 * jax.random.normal(kx, (B, C, H, W), jnp.float32)

    params = {
        # conv weights stored HWIO (kh, kw, Cin, Cout), no bias
        "w1": 0.3 * jax.random.normal(kw1, (3, 3, C, C), jnp.float32),
        "w2": 0.3 * jax.random.normal(kw2, (3, 3, C, C), jnp.float32),
        "bn1": {
            "gamma": 1.0 + 0.1 * jax.random.normal(kg1, (C,), jnp.float32),
            "beta": 0.1 * jax.random.normal(kb1, (C,), jnp.float32),
            "mean": 0.1 * jax.random.normal(km1, (C,), jnp.float32),
            "var": jnp.abs(jax.random.normal(kv1, (C,), jnp.float32)) + 0.5,
        },
        "bn2": {
            "gamma": 1.0 + 0.1 * jax.random.normal(kg2, (C,), jnp.float32),
            "beta": 0.1 * jax.random.normal(kb2, (C,), jnp.float32),
            "mean": 0.1 * jax.random.normal(km2, (C,), jnp.float32),
            "var": jnp.abs(jax.random.normal(kv2, (C,), jnp.float32)) + 0.5,
        },
    }

    out = jax.block_until_ready(basic_block_forward(x, params, cnf="ADD"))
    ref = jax.block_until_ready(_ref_forward(x, params, cnf="ADD"))

    assert out.shape == (B, C, H, W)
    # Heaviside outputs: elements landing within f32 reduction-order noise of
    # the threshold can legitimately flip between the kernel's single merged-K
    # matmul and lax.conv's accumulation order, so allow a tiny flip budget
    # instead of strict allclose.
    n_bad = int(jnp.sum(jnp.abs(out - ref) > 1e-3))
    assert n_bad <= max(2, out.size // 500), f"{n_bad}/{out.size} mismatches vs reference"

    print("KERNEL_OK")
</pallas_src>

<mosaic_0001>
module attributes {stable_mosaic.version = 11 : i64} {
  func.func @kernel(%arg0: i32, %arg1: memref<16x128xf32, #tpu.memory_space<vmem>>, %arg2: memref<384x128xbf16, #tpu.memory_space<vmem>>, %arg3: memref<1x128xf32, #tpu.memory_space<vmem>>, %arg4: memref<384x128xbf16, #tpu.memory_space<vmem>>, %arg5: memref<1x128xf32, #tpu.memory_space<vmem>>, %arg6: memref<16x128xf32, #tpu.memory_space<vmem>>, %arg7: memref<16x384xbf16, #tpu.memory_space<vmem>>, %arg8: memref<16x384xbf16, #tpu.memory_space<vmem>>) attributes {dimension_semantics = [#tpu.dimension_semantics<parallel>], iteration_bounds = array<i64: 2>, scalar_prefetch = 0 : i64, scratch_operands = 2 : i64, tpu.core_type = #tpu.core_type<tc>, window_params = [{transform_indices = @transform_0, window_bounds = array<i64: 16, 128>}, {pipeline_mode = #tpu.pipeline_mode<synchronous>, transform_indices = @transform_1, window_bounds = array<i64: 384, 128>}, {pipeline_mode = #tpu.pipeline_mode<synchronous>, transform_indices = @transform_2, window_bounds = array<i64: 1, 128>}, {pipeline_mode = #tpu.pipeline_mode<synchronous>, transform_indices = @transform_3, window_bounds = array<i64: 384, 128>}, {pipeline_mode = #tpu.pipeline_mode<synchronous>, transform_indices = @transform_4, window_bounds = array<i64: 1, 128>}, {transform_indices = @transform_5, window_bounds = array<i64: 16, 128>}]} {
    %c0 = arith.constant 0 : index
    %c0_0 = arith.constant 0 : index
    %0 = vector.load %arg1[%c0, %c0_0] : memref<16x128xf32, #tpu.memory_space<vmem>>, vector<16x128xf32>
    %1 = arith.truncf %0 : vector<16x128xf32> to vector<16x128xbf16>
    %cst = arith.constant 0.000000e+00 : bf16
    %2 = vector.broadcast %cst : bf16 to vector<1x128xbf16>
    %c0_1 = arith.constant 0 : index
    %c0_2 = arith.constant 0 : index
    %3 = vector.load %arg7[%c0_1, %c0_2] : memref<16x384xbf16, #tpu.memory_space<vmem>>, vector<1x128xbf16>
    tpu.vector_store %arg7[%c0_1, %c0_2], %2 {strides = array<i32>} : memref<16x384xbf16, #tpu.memory_space<vmem>>, vector<1x128xbf16>,
    %4 = vector.extract_strided_slice %1 {offsets = [0, 0], sizes = [15, 128], strides = [1, 1]} : vector<16x128xbf16> to vector<15x128xbf16>
    %c1 = arith.constant 1 : index
    %c0_3 = arith.constant 0 : index
    %5 = vector.load %arg7[%c1, %c0_3] : memref<16x384xbf16, #tpu.memory_space<vmem>>, vector<15x128xbf16>
    tpu.vector_store %arg7[%c1, %c0_3], %4 {strides = array<i32>} : memref<16x384xbf16, #tpu.memory_space<vmem>>, vector<15x128xbf16>,
    %c0_4 = arith.constant 0 : index
    %c128 = arith.constant 128 : index
    %6 = vector.load %arg7[%c0_4, %c128] : memref<16x384xbf16, #tpu.memory_space<vmem>>, vector<16x128xbf16>
    tpu.vector_store %arg7[%c0_4, %c128], %1 {strides = array<i32>} : memref<16x384xbf16, #tpu.memory_space<vmem>>, vector<16x128xbf16>,
    %7 = vector.extract_strided_slice %1 {offsets = [1, 0], sizes = [15, 128], strides = [1, 1]} : vector<16x128xbf16> to vector<15x128xbf16>
    %c0_5 = arith.constant 0 : index
    %c256 = arith.constant 256 : index
    %8 = vector.load %arg7[%c0_5, %c256] : memref<16x384xbf16, #tpu.memory_space<vmem>>, vector<15x128xbf16>
    tpu.vector_store %arg7[%c0_5, %c256], %7 {strides = array<i32>} : memref<16x384xbf16, #tpu.memory_space<vmem>>, vector<15x128xbf16>,
    %c15 = arith.constant 15 : index
    %c256_6 = arith.constant 256 : index
    %9 = vector.load %arg7[%c15, %c256_6] : memref<16x384xbf16, #tpu.memory_space<vmem>>, vector<1x128xbf16>
    tpu.vector_store %arg7[%c15, %c256_6], %2 {strides = array<i32>} : memref<16x384xbf16, #tpu.memory_space<vmem>>, vector<1x128xbf16>,
    %c0_7 = arith.constant 0 : index
    %c0_8 = arith.constant 0 : index
    %10 = vector.load %arg7[%c0_7, %c0_8] : memref<16x384xbf16, #tpu.memory_space<vmem>>, vector<16x384xbf16>
    %c0_9 = arith.constant 0 : index
    %c0_10 = arith.constant 0 : index
    %11 = vector.load %arg2[%c0_9, %c0_10] : memref<384x128xbf16, #tpu.memory_space<vmem>>, vector<384x128xbf16>
    %cst_11 = arith.constant dense<0.000000e+00> : vector<16x128xf32>
    %12 = tpu.matmul %10, %11, %cst_11 {dimension_numbers = #tpu.dot_dimension_numbers<[1], [0], [0], [1], [0, 0, 1, 1], [], []>} : vector<16x384xbf16>, vector<384x128xbf16>, vector<16x128xf32> -> vector<16x128xf32>
    %c0_12 = arith.constant 0 : index
    %c0_13 = arith.constant 0 : index
    %13 = vector.load %arg3[%c0_12, %c0_13] : memref<1x128xf32, #tpu.memory_space<vmem>>, vector<1x128xf32>
    %14 = vector.broadcast %13 : vector<1x128xf32> to vector<16x128xf32>
    %15 = arith.cmpf oge, %12, %14 : vector<16x128xf32>
    %16 = arith.extui %15 : vector<16x128xi1> to vector<16x128xi32>
    %17 = arith.sitofp %16 : vector<16x128xi32> to vector<16x128xf32>
    %18 = arith.truncf %17 : vector<16x128xf32> to vector<16x128xbf16>
    %cst_14 = arith.constant 0.000000e+00 : bf16
    %19 = vector.broadcast %cst_14 : bf16 to vector<1x128xbf16>
    %c0_15 = arith.constant 0 : index
    %c0_16 = arith.constant 0 : index
    %20 = vector.load %arg8[%c0_15, %c0_16] : memref<16x384xbf16, #tpu.memory_space<vmem>>, vector<1x128xbf16>
    tpu.vector_store %arg8[%c0_15, %c0_16], %19 {strides = array<i32>} : memref<16x384xbf16, #tpu.memory_space<vmem>>, vector<1x128xbf16>,
    %21 = vector.extract_strided_slice %18 {offsets = [0, 0], sizes = [15, 128], strides = [1, 1]} : vector<16x128xbf16> to vector<15x128xbf16>
    %c1_17 = arith.constant 1 : index
    %c0_18 = arith.constant 0 : index
    %22 = vector.load %arg8[%c1_17, %c0_18] : memref<16x384xbf16, #tpu.memory_space<vmem>>, vector<15x128xbf16>
    tpu.vector_store %arg8[%c1_17, %c0_18], %21 {strides = array<i32>} : memref<16x384xbf16, #tpu.memory_space<vmem>>, vector<15x128xbf16>,
    %c0_19 = arith.constant 0 : index
    %c128_20 = arith.constant 128 : index
    %23 = vector.load %arg8[%c0_19, %c128_20] : memref<16x384xbf16, #tpu.memory_space<vmem>>, vector<16x128xbf16>
    tpu.vector_store %arg8[%c0_19, %c128_20], %18 {strides = array<i32>} : memref<16x384xbf16, #tpu.memory_space<vmem>>, vector<16x128xbf16>,
    %24 = vector.extract_strided_slice %18 {offsets = [1, 0], sizes = [15, 128], strides = [1, 1]} : vector<16x128xbf16> to vector<15x128xbf16>
    %c0_21 = arith.constant 0 : index
    %c256_22 = arith.constant 256 : index
    %25 = vector.load %arg8[%c0_21, %c256_22] : memref<16x384xbf16, #tpu.memory_space<vmem>>, vector<15x128xbf16>
    tpu.vector_store %arg8[%c0_21, %c256_22], %24 {strides = array<i32>} : memref<16x384xbf16, #tpu.memory_space<vmem>>, vector<15x128xbf16>,
    %c15_23 = arith.constant 15 : index
    %c256_24 = arith.constant 256 : index
    %26 = vector.load %arg8[%c15_23, %c256_24] : memref<16x384xbf16, #tpu.memory_space<vmem>>, vector<1x128xbf16>
    tpu.vector_store %arg8[%c15_23, %c256_24], %19 {strides = array<i32>} : memref<16x384xbf16, #tpu.memory_space<vmem>>, vector<1x128xbf16>,
    %c0_25 = arith.constant 0 : index
    %c0_26 = arith.constant 0 : index
    %27 = vector.load %arg8[%c0_25, %c0_26] : memref<16x384xbf16, #tpu.memory_space<vmem>>, vector<16x384xbf16>
    %c0_27 = arith.constant 0 : index
    %c0_28 = arith.constant 0 : index
    %28 = vector.load %arg4[%c0_27, %c0_28] : memref<384x128xbf16, #tpu.memory_space<vmem>>, vector<384x128xbf16>
    %cst_29 = arith.constant dense<0.000000e+00> : vector<16x128xf32>
    %29 = tpu.matmul %27, %28, %cst_29 {dimension_numbers = #tpu.dot_dimension_numbers<[1], [0], [0], [1], [0, 0, 1, 1], [], []>} : vector<16x384xbf16>, vector<384x128xbf16>, vector<16x128xf32> -> vector<16x128xf32>
    %c0_30 = arith.constant 0 : index
    %c0_31 = arith.constant 0 : index
    %30 = vector.load %arg5[%c0_30, %c0_31] : memref<1x128xf32, #tpu.memory_space<vmem>>, vector<1x128xf32>
    %31 = vector.broadcast %30 : vector<1x128xf32> to vector<16x128xf32>
    %32 = arith.cmpf oge, %29, %31 : vector<16x128xf32>
    %33 = arith.extui %32 : vector<16x128xi1> to vector<16x128xi32>
    %34 = arith.sitofp %33 : vector<16x128xi32> to vector<16x128xf32>
    %35 = arith.addf %34, %0 : vector<16x128xf32>
    %c0_32 = arith.constant 0 : index
    %c0_33 = arith.constant 0 : index
    %36 = vector.load %arg6[%c0_32, %c0_33] : memref<16x128xf32, #tpu.memory_space<vmem>>, vector<16x128xf32>
    tpu.vector_store %arg6[%c0_32, %c0_33], %35 {strides = array<i32>} : memref<16x128xf32, #tpu.memory_space<vmem>>, vector<16x128xf32>,
    return
  }
  func.func @transform_0(%arg0: i32) -> (i32, i32) {
    %c0_i32 = arith.constant 0 : i32
    %c0_i32_0 = arith.constant 0 : i32
    return %arg0, %c0_i32 : i32, i32
  }
  func.func @transform_1(%arg0: i32) -> (i32, i32) {
    %c0_i32 = arith.constant 0 : i32
    %c0_i32_0 = arith.constant 0 : i32
    %c0_i32_1 = arith.constant 0 : i32
    return %c0_i32, %c0_i32_0 : i32, i32
  }
  func.func @transform_2(%arg0: i32) -> (i32, i32) {
    %c0_i32 = arith.constant 0 : i32
    %c0_i32_0 = arith.constant 0 : i32
    %c0_i32_1 = arith.constant 0 : i32
    return %c0_i32, %c0_i32_0 : i32, i32
  }
  func.func @transform_3(%arg0: i32) -> (i32, i32) {
    %c0_i32 = arith.constant 0 : i32
    %c0_i32_0 = arith.constant 0 : i32
    %c0_i32_1 = arith.constant 0 : i32
    return %c0_i32, %c0_i32_0 : i32, i32
  }
  func.func @transform_4(%arg0: i32) -> (i32, i32) {
    %c0_i32 = arith.constant 0 : i32
    %c0_i32_0 = arith.constant 0 : i32
    %c0_i32_1 = arith.constant 0 : i32
    return %c0_i32, %c0_i32_0 : i32, i32
  }
  func.func @transform_5(%arg0: i32) -> (i32, i32) {
    %c0_i32 = arith.constant 0 : i32
    %c0_i32_0 = arith.constant 0 : i32
    return %arg0, %c0_i32 : i32, i32
  }
}

</mosaic_0001>

<llo_original>
// kernel: tpu_custom_call.1
$region0: #{tpu_custom_call.1}
  #allocation0 [shape = 'u32[]', space=smem, size = 0x4, offset = 0x4, fixed_abs, tag = 'smem constant byte address 0x4 - core index']
  #allocation1 [shape = 'u32[72,128]{1,0:T(1,128)}', space=vmem, size = 0x9000, scoped, tag = 'internal scratch']
  #allocation2 [shape = 'bf16[16,384]{1,0:T(8,128)(2,1)}', space=vmem, size = 0x3000, scoped, tag = 'scratch operand']
  #allocation3 [shape = 'bf16[16,384]{1,0:T(8,128)(2,1)}', space=vmem, size = 0x3000, scoped, tag = 'scratch operand']
  %s0 = inlined_call_operand.hbm [shape: f32[32,128], index: 0, kind: input, shape index: {}]
  %s1 = inlined_call_operand.hbm [shape: bf16[384,128], index: 1, kind: input, shape index: {}]
  %s2 = inlined_call_operand.vmem [shape: f32[1,128], index: 2, kind: input, shape index: {}]
  %s3 = inlined_call_operand.hbm [shape: bf16[384,128], index: 3, kind: input, shape index: {}]
  %s4 = inlined_call_operand.vmem [shape: f32[1,128], index: 4, kind: input, shape index: {}]
  %s5 = inlined_call_operand.hbm [shape: f32[32,128], index: 5, kind: output, shape index: {}]
  %s6 = sld [smem:[#allocation0]]
  $region65: #{tpu_custom_call.1} parent=0
    _
  %s8 = ssub.s32 1, %s6
  %s9 = scalar_select 0, %s8, %s6
  $region1: #{tpu_custom_call.1} parent=0
    #allocation4 [shape = 'u8[16384]{0}', space=vmem, size = 0x4000, scoped, tag = 'input window, operand 0']
    #allocation5 [shape = 's32[2]{0}', space=sflag, size = 0x8, scoped, tag = 'scoped memory for tpu_custom_call.1']
    #allocation6 [shape = 's32[2]{0}', space=sflag, size = 0x8, scoped, tag = 'scoped memory for tpu_custom_call.1']
    #allocation7 [shape = 'u8[98304]{0}', space=vmem, size = 0x18000, scoped, tag = 'input window, operand 1, single buffered']
    #allocation8 [shape = 's32[1]{0}', space=sflag, size = 0x4, scoped, tag = 'scoped memory for tpu_custom_call.1']
    #allocation9 [shape = 'u8[98304]{0}', space=vmem, size = 0x18000, scoped, tag = 'input window, operand 3, single buffered']
    #allocation10 [shape = 'u8[16384]{0}', space=vmem, size = 0x4000, scoped, tag = 'output window, operand 0']
    %10 = vsyncpa [#allocation5], 0
    %s11 = scalar_lea.sflag [#allocation5], 1
    %12 = vsyncpa %s11, 0
    %13 = vsyncpa [#allocation8], 0
    %14 = vsyncpa [#allocation6], 0
    %s15 = scalar_lea.sflag [#allocation6], 1
    %16 = vsyncpa %s15, 0
    loop: start=0, step=1, limit=4
    $region2: #{tpu_custom_call.1} parent=1 // loop_pre_header
      _
    $region3: #{tpu_custom_call.1} parent=1 // loop_header
      %s18 = sphi 0, %s22
      %p19 = scmp.ge.s32.totalorder %s18, 4
      %s28 = sphi 0, %s30
      %s31 = sphi 0, %s28
      %s32 = sphi 0, %s31
      %s48 = sphi 0, %s32
      %s52 = sphi 0, %s52
      %s54 = sphi 0, %s52
      %s55 = sphi 0, %s54
      %s69 = sphi 0, %s55
      %s73 = sphi 0, %s73
      %s75 = sphi 0, %s73
      %s76 = sphi 0, %s75
      %s90 = sphi 0, %s76
      %s94 = sphi 0, %s94
      %s96 = sphi 0, %s94
      %s97 = sphi 0, %s96
      %s111 = sphi 0, %s97
      %s115 = sphi 0, %s115
      %s117 = sphi 0, %s115
      %s118 = sphi 0, %s117
      %s132 = sphi 0, %s118
      %s138 = sphi 0, %s140
      %s141 = sphi 0, %s138
      %s142 = sphi 0, %s141
      %s158 = sphi 0, %s142
    $region4: #{tpu_custom_call.1} parent=1 // loop_header_branch
      %21 = sbr.rel (%p19) target = $region8
    $region5: #{tpu_custom_call.1} parent=1 // loop_body
      %s23 = ssub.s32 %s18, 1
      %s24 = ssub.s32 %s18, 2
      %s25 = sadd.s32 %s18, 1
      %s26 = ssub.s32 %s18, %s25
      %p27 = scmp.eq.s32.totalorder %s26, 0
      %s29 = sadd.s32 %s28, 1
      %s30 = scalar_select %p27, %s28, %s29
      %p33 = pneg %p27
      %p34 = scmp.eq.s32.totalorder %s18, 1
      %p35 = por %p33, %p34
      %p36 = scmp.ne.s32.totalorder %s28, %s31
      %p37 = scmp.eq.s32.totalorder %s18, 0
      %p38 = por %p36, %p37
      %p39 = scmp.ne.s32.totalorder %s28, %s31
      %p40 = scmp.eq.s32.totalorder %s23, 1
      %p41 = por %p39, %p40
      %p42 = scmp.ne.s32.totalorder %s31, %s32
      %p43 = scmp.eq.s32.totalorder %s23, 0
      %p44 = por %p42, %p43
      %p45 = scmp.ne.s32.totalorder %s31, %s32
      %p46 = scmp.eq.s32.totalorder %s24, 1
      %p47 = por %p45, %p46
      %p49 = scmp.ne.s32.totalorder %s32, %s48
      %p50 = scmp.eq.s32.totalorder %s24, 0
      %p51 = por %p49, %p50
      %s53 = sadd.s32 %s52, 1
      %p56 = scmp.eq.s32.totalorder %s18, 1
      %p57 = scmp.ne.s32.totalorder %s52, %s54
      %p58 = scmp.eq.s32.totalorder %s18, 0
      %p59 = por %p57, %p58
      %p60 = scmp.ne.s32.totalorder %s52, %s54
      %p61 = scmp.eq.s32.totalorder %s23, 1
      %p62 = por %p60, %p61
      %p63 = scmp.ne.s32.totalorder %s54, %s55
      %p64 = scmp.eq.s32.totalorder %s23, 0
      %p65 = por %p63, %p64
      %p66 = scmp.ne.s32.totalorder %s54, %s55
      %p67 = scmp.eq.s32.totalorder %s24, 1
      %p68 = por %p66, %p67
      %p70 = scmp.ne.s32.totalorder %s55, %s69
      %p71 = scmp.eq.s32.totalorder %s24, 0
      %p72 = por %p70, %p71
      %s74 = sadd.s32 %s73, 1
      %p77 = scmp.eq.s32.totalorder %s18, 1
      %p78 = scmp.ne.s32.totalorder %s73, %s75
      %p79 = scmp.eq.s32.totalorder %s18, 0
      %p80 = por %p78, %p79
      %p81 = scmp.ne.s32.totalorder %s73, %s75
      %p82 = scmp.eq.s32.totalorder %s23, 1
      %p83 = por %p81, %p82
      %p84 = scmp.ne.s32.totalorder %s75, %s76
      %p85 = scmp.eq.s32.totalorder %s23, 0
      %p86 = por %p84, %p85
      %p87 = scmp.ne.s32.totalorder %s75, %s76
      %p88 = scmp.eq.s32.totalorder %s24, 1
      %p89 = por %p87, %p88
      %p91 = scmp.ne.s32.totalorder %s76, %s90
      %p92 = scmp.eq.s32.totalorder %s24, 0
      %p93 = por %p91, %p92
      %s95 = sadd.s32 %s94, 1
      %p98 = scmp.eq.s32.totalorder %s18, 1
      %p99 = scmp.ne.s32.totalorder %s94, %s96
      %p100 = scmp.eq.s32.totalorder %s18, 0
      %p101 = por %p99, %p100
      %p102 = scmp.ne.s32.totalorder %s94, %s96
      %p103 = scmp.eq.s32.totalorder %s23, 1
      %p104 = por %p102, %p103
      %p105 = scmp.ne.s32.totalorder %s96, %s97
      %p106 = scmp.eq.s32.totalorder %s23, 0
      %p107 = por %p105, %p106
      %p108 = scmp.ne.s32.totalorder %s96, %s97
      %p109 = scmp.eq.s32.totalorder %s24, 1
      %p110 = por %p108, %p109
      %p112 = scmp.ne.s32.totalorder %s97, %s111
      %p113 = scmp.eq.s32.totalorder %s24, 0
      %p114 = por %p112, %p113
      %s116 = sadd.s32 %s115, 1
      %p119 = scmp.eq.s32.totalorder %s18, 1
      %p120 = scmp.ne.s32.totalorder %s115, %s117
      %p121 = scmp.eq.s32.totalorder %s18, 0
      %p122 = por %p120, %p121
      %p123 = scmp.ne.s32.totalorder %s115, %s117
      %p124 = scmp.eq.s32.totalorder %s23, 1
      %p125 = por %p123, %p124
      %p126 = scmp.ne.s32.totalorder %s117, %s118
      %p127 = scmp.eq.s32.totalorder %s23, 0
      %p128 = por %p126, %p127
      %p129 = scmp.ne.s32.totalorder %s117, %s118
      %p130 = scmp.eq.s32.totalorder %s24, 1
      %p131 = por %p129, %p130
      %p133 = scmp.ne.s32.totalorder %s118, %s132
      %p134 = scmp.eq.s32.totalorder %s24, 0
      %p135 = por %p133, %p134
      %s136 = ssub.s32 %s18, %s25
      %p137 = scmp.eq.s32.totalorder %s136, 0
      %s139 = sadd.s32 %s138, 1
      %s140 = scalar_select %p137, %s138, %s139
      %p143 = pneg %p137
      %p144 = scmp.eq.s32.totalorder %s18, 1
      %p145 = por %p143, %p144
      %p146 = scmp.ne.s32.totalorder %s138, %s141
      %p147 = scmp.eq.s32.totalorder %s18, 0
      %p148 = por %p146, %p147
      %p149 = scmp.ne.s32.totalorder %s138, %s141
      %p150 = scmp.eq.s32.totalorder %s23, 1
      %p151 = por %p149, %p150
      %p152 = scmp.ne.s32.totalorder %s141, %s142
      %p153 = scmp.eq.s32.totalorder %s23, 0
      %p154 = por %p152, %p153
      %p155 = scmp.ne.s32.totalorder %s141, %s142
      %p156 = scmp.eq.s32.totalorder %s24, 1
      %p157 = por %p155, %p156
      %p159 = scmp.ne.s32.totalorder %s142, %s158
      %p160 = scmp.eq.s32.totalorder %s24, 0
      %p161 = por %p159, %p160
      %p162 = scmp.le.s32.totalorder 1, %s18
      %p163 = scmp.lt.s32.totalorder %s18, 3
      %p164 = pnand %p162, %p163
      %p165 = pneg %p164
      // Predicated region
      $region9: #{tpu_custom_call.1} parent=5 // pred_check
        _
      $region10: #{tpu_custom_call.1} parent=5 // pred_check_branch
        %167 = sbr.rel (%p164) target = $region12
      $region11: #{tpu_custom_call.1} parent=5 // pred_region
        %s168 = ssub.s32 %s18, 1
        // Predicated region
        $region13: #{tpu_custom_call.1} parent=11 // pred_check
          %p169 = pneg %p65
        $region14: #{tpu_custom_call.1} parent=11 // pred_check_branch
          %171 = sbr.rel (%p169) target = $region16
        $region15: #{tpu_custom_call.1} parent=11 // pred_region
          %173 = vsyncadd [#allocation8], 0
          %s174 = sshll.u32 %s1, 4
          %s175 = int_to_ptr.hbm [resolvable:$true] %s174
          %s176 = sshll.u32 [#allocation7], 4
          %s177 = int_to_ptr.vmem [resolvable:$true] %s176
          %182 = dma.hbm_to_vmem [thread:$0]  %s175, 3072, %s177, [#allocation8], 64, 64, 4
        $region16: #{tpu_custom_call.1} parent=11 // pred_fallthru
          _
        // Predicated region
        $region17: #{tpu_custom_call.1} parent=11 // pred_check
          %p183 = pneg %p86
        $region18: #{tpu_custom_call.1} parent=11 // pred_check_branch
          %185 = sbr.rel (%p183) target = $region20
        $region19: #{tpu_custom_call.1} parent=11 // pred_region
          _
        $region20: #{tpu_custom_call.1} parent=11 // pred_fallthru
          _
        // Predicated region
        $region21: #{tpu_custom_call.1} parent=11 // pred_check
          %p186 = pneg %p107
        $region22: #{tpu_custom_call.1} parent=11 // pred_check_branch
          %188 = sbr.rel (%p186) target = $region24
        $region23: #{tpu_custom_call.1} parent=11 // pred_region
          %190 = vsyncadd [#allocation8], 0
          %s191 = sshll.u32 %s3, 4
          %s192 = int_to_ptr.hbm [resolvable:$true] %s191
          %s193 = sshll.u32 [#allocation9], 4
          %s194 = int_to_ptr.vmem [resolvable:$true] %s193
          %199 = dma.hbm_to_vmem [thread:$0]  %s192, 3072, %s194, [#allocation8], 64, 64, 4
        $region24: #{tpu_custom_call.1} parent=11 // pred_fallthru
          _
        // Predicated region
        $region25: #{tpu_custom_call.1} parent=11 // pred_check
          %p200 = pneg %p128
        $region26: #{tpu_custom_call.1} parent=11 // pred_check_branch
          %202 = sbr.rel (%p200) target = $region28
        $region27: #{tpu_custom_call.1} parent=11 // pred_region
          _
        $region28: #{tpu_custom_call.1} parent=11 // pred_fallthru
          _
      $region12: #{tpu_custom_call.1} parent=5 // pred_fallthru
        _
      %p203 = scmp.lt.s32.totalorder %s18, 2
      // Predicated region
      $region29: #{tpu_custom_call.1} parent=5 // pred_check
        %p204 = pneg %p203
      $region30: #{tpu_custom_call.1} parent=5 // pred_check_branch
        %206 = sbr.rel (%p204) target = $region32
      $region31: #{tpu_custom_call.1} parent=5 // pred_region
        // Predicated region
        $region33: #{tpu_custom_call.1} parent=31 // pred_check
          %p207 = pneg %p38
        $region34: #{tpu_custom_call.1} parent=31 // pred_check_branch
          %209 = sbr.rel (%p207) target = $region36
        $region35: #{tpu_custom_call.1} parent=31 // pred_region
          %s210 = sand.u32 %s28, 1
          %s211 = scalar_lea.sflag [#allocation5], %s210
          %s212 = sand.u32 %s28, 1
          %s213 = smul.addr %s212, 16
          %s214 = scalar_lea.vmem [#allocation4], %s213
          %s215 = smul.u32 2, %s18
          %217 = vsyncadd %s211, 0
          %s218 = smul.addr %s215, 8
          %s219 = scalar_lea.hbm %s0, %s218
          %s220 = sshll.u32 %s219, 4
          %s221 = int_to_ptr.hbm [resolvable:$true] %s220
          %s222 = sshll.u32 %s214, 4
          %s223 = int_to_ptr.vmem [resolvable:$true] %s222
          %228 = dma.hbm_to_vmem [thread:$0]  %s221, 256, %s223, %s211, 128, 128, 8
        $region36: #{tpu_custom_call.1} parent=31 // pred_fallthru
          _
      $region32: #{tpu_custom_call.1} parent=5 // pred_fallthru
        _
      %p229 = scmp.le.s32.totalorder 1, %s18
      %p230 = scmp.lt.s32.totalorder %s18, 3
      %p231 = pnand %p229, %p230
      %p232 = pneg %p231
      // Predicated region
      $region37: #{tpu_custom_call.1} parent=5 // pred_check
        _
      $region38: #{tpu_custom_call.1} parent=5 // pred_check_branch
        %234 = sbr.rel (%p231) target = $region40
      $region39: #{tpu_custom_call.1} parent=5 // pred_region
        %s235 = ssub.s32 %s18, 1
        %s236 = sand.u32 %s31, 1
        %s237 = scalar_lea.sflag [#allocation5], %s236
        %s238 = sand.u32 %s31, 1
        %s239 = smul.addr %s238, 16
        %s240 = scalar_lea.vmem [#allocation4], %s239
        // Predicated region
        $region41: #{tpu_custom_call.1} parent=39 // pred_check
          %p241 = pneg %p44
        $region42: #{tpu_custom_call.1} parent=39 // pred_check_branch
          %243 = sbr.rel (%p241) target = $region44
        $region43: #{tpu_custom_call.1} parent=39 // pred_region
          %245 = dma.done %s237, 256
        $region44: #{tpu_custom_call.1} parent=39 // pred_fallthru
          _
        // Predicated region
        $region45: #{tpu_custom_call.1} parent=39 // pred_check
          %p246 = pneg %p65
        $region46: #{tpu_custom_call.1} parent=39 // pred_check_branch
          %248 = sbr.rel (%p246) target = $region48
        $region47: #{tpu_custom_call.1} parent=39 // pred_region
          %250 = dma.done [#allocation8], 3072
        $region48: #{tpu_custom_call.1} parent=39 // pred_fallthru
          _
        // Predicated region
        $region49: #{tpu_custom_call.1} parent=39 // pred_check
          %p251 = pneg %p107
        $region50: #{tpu_custom_call.1} parent=39 // pred_check_branch
          %253 = sbr.rel (%p251) target = $region52
        $region51: #{tpu_custom_call.1} parent=39 // pred_region
          %255 = dma.done [#allocation8], 3072
        $region52: #{tpu_custom_call.1} parent=39 // pred_fallthru
          _
        %s256 = sand.u32 %s31, 1
        %s257 = scalar_lea.sflag [#allocation5], %s256
        %s258 = sand.u32 %s31, 1
        %s259 = smul.addr %s258, 16
        %s260 = scalar_lea.vmem [#allocation4], %s259
        %p261 = pneg %p44
        %p262 = pneg %p41
        %p263 = pneg %p65
        %p264 = pneg %p62
        %p265 = pneg %p86
        %p266 = pneg %p83
        %p267 = pneg %p107
        %p268 = pneg %p104
        %p269 = pneg %p128
        %p270 = pneg %p125
        %p271 = pneg %p154
        %p272 = pneg %p151
        %s273 = sand.u32 %s141, 1
        %s274 = scalar_lea.sflag [#allocation6], %s273
        %s275 = sand.u32 %s141, 1
        %s276 = smul.addr %s275, 16
        %s277 = scalar_lea.vmem [#allocation10], %s276
        %s278 = smul.u32 2, %s23
        %s279 = smul.u32 2, %s23
        %v281 = vld [vmem:[%s240] sm:$0xff]
        %v282 = vld [vmem:[%s240 + $0x8] sm:$0xff]
        %v283 = vpack.c.bf16 %v281, %v281
        %v284 = vpack.c.bf16 %v282, %v282
        %vm285 = vcmask 1040384
        %vm286 = vsmask.f32 256
        %vm287 = vmand %vm285, %vm286
        %v288 = vld [vmem:[#allocation2] sm:$0x1]
        %v289 = vsel %vm287, 0, %v288
        %290 = vst [vmem:[#allocation2] sm:$0x1] %v289
        %vm291 = vsmask.f32 4368
        %vm292 = vmor %vm286, %vm291
        %v294 = vshrl.u32 %v283, 16
        %v296 = vrot.slane %v294, 7
        %v297 = vshll.u32 %v283, 16
        %v299 = vor.u32 %v296, %v297
        %v300 = vrot.slane %v296, 4
        %v302 = vshrl.u32 %v284, 16
        %v304 = vrot.slane %v302, 7
        %v305 = vshll.u32 %v284, 16
        %v307 = vor.u32 %v304, %v305
        %v308 = vsel %vm292, %v300, %v307
        %vm311 = vcmask 1043456
        %vm312 = vsmask.f32 7938
        %vm313 = vmand %vm311, %vm312
        %v314 = vld [vmem:[#allocation2] sm:$0xf]
        %v315 = vsel %vm313, %v299, %v314
        %316 = vst [vmem:[#allocation2] sm:$0xf] %v315
        %317 = vst [vmem:[#allocation2 + $0xc] sm:$0xf] %v308
        %318 = vst [vmem:[#allocation2 + $0x4] sm:$0xf] %v283
        %319 = vst [vmem:[#allocation2 + $0x10] sm:$0xf] %v284
        %vm320 = vsmask.f32 3328
        %vm321 = vsmask.f32 7440
        %vm322 = vmor %vm320, %vm321
        %v323 = vrot.slane %v294, 4
        %v324 = vrot.slane %v297, 5
        %v325 = vor.u32 %v323, %v324
        %v326 = vrot.slane %v325, 4
        %v327 = vrot.slane %v305, 5
        %v328 = vsel %vm322, %v326, %v327
        %v329 = vrot.slane %v302, 4
        %v330 = vor.u32 %v329, %v327
        %v331 = vrot.slane %v330, 4
        %334 = vst [vmem:[#allocation2 + $0x8] sm:$0xf] %v328
        %vm335 = vmand %vm311, %vm320
        %v336 = vld [vmem:[#allocation2 + $0x14] sm:$0xf]
        %v337 = vsel %vm335, %v331, %v336
        %338 = vst [vmem:[#allocation2 + $0x14] sm:$0xf] %v337
        %vm339 = vcmask 1043459
        %vm340 = vsmask.f32 7950
        %vm341 = vmand %vm339, %vm340
        %v342 = vld [vmem:[#allocation2 + $0x14] sm:$0x8]
        %v343 = vsel %vm341, 0, %v342
        %344 = vst [vmem:[#allocation2 + $0x14] sm:$0x8] %v343
        %v345 = vld [vmem:[#allocation2] sm:$0xff]
        %v346 = vld [vmem:[#allocation2 + $0x8] sm:$0xf]
        %v347 = vld [vmem:[#allocation2 + $0xc] sm:$0xff]
        %v348 = vld [vmem:[#allocation2 + $0x14] sm:$0xf]
        %v349 = vld [vmem:[#allocation7] sm:$0xf]
        %v350 = vld [vmem:[#allocation7 + $0x4] sm:$0xf]
        %v351 = vld [vmem:[#allocation7 + $0x8] sm:$0xf]
        %v352 = vld [vmem:[#allocation7 + $0xc] sm:$0xf]
        %v353 = vld [vmem:[#allocation7 + $0x10] sm:$0xf]
        %v354 = vld [vmem:[#allocation7 + $0x14] sm:$0xf]
        %v355 = vld [vmem:[#allocation7 + $0x18] sm:$0xf]
        %v356 = vld [vmem:[#allocation7 + $0x1c] sm:$0xf]
        %v357 = vld [vmem:[#allocation7 + $0x20] sm:$0xf]
        %v358 = vld [vmem:[#allocation7 + $0x24] sm:$0xf]
        %v359 = vld [vmem:[#allocation7 + $0x28] sm:$0xf]
        %v360 = vld [vmem:[#allocation7 + $0x2c] sm:$0xf]
        %v361 = vld [vmem:[#allocation7 + $0x30] sm:$0xf]
        %v362 = vld [vmem:[#allocation7 + $0x34] sm:$0xf]
        %v363 = vld [vmem:[#allocation7 + $0x38] sm:$0xf]
        %v364 = vld [vmem:[#allocation7 + $0x3c] sm:$0xf]
        %v365 = vld [vmem:[#allocation7 + $0x40] sm:$0xf]
        %v366 = vld [vmem:[#allocation7 + $0x44] sm:$0xf]
        %v367 = vld [vmem:[#allocation7 + $0x48] sm:$0xf]
        %v368 = vld [vmem:[#allocation7 + $0x4c] sm:$0xf]
        %v369 = vld [vmem:[#allocation7 + $0x50] sm:$0xf]
        %v370 = vld [vmem:[#allocation7 + $0x54] sm:$0xf]
        %v371 = vld [vmem:[#allocation7 + $0x58] sm:$0xf]
        %v372 = vld [vmem:[#allocation7 + $0x5c] sm:$0xf]
        %v373 = vld [vmem:[#allocation7 + $0x60] sm:$0xf]
        %v374 = vld [vmem:[#allocation7 + $0x64] sm:$0xf]
        %v375 = vld [vmem:[#allocation7 + $0x68] sm:$0xf]
        %v376 = vld [vmem:[#allocation7 + $0x6c] sm:$0xf]
        %v377 = vld [vmem:[#allocation7 + $0x70] sm:$0xf]
        %v378 = vld [vmem:[#allocation7 + $0x74] sm:$0xf]
        %v379 = vld [vmem:[#allocation7 + $0x78] sm:$0xf]
        %v380 = vld [vmem:[#allocation7 + $0x7c] sm:$0xf]
        %v381 = vld [vmem:[#allocation7 + $0x80] sm:$0xf]
        %v382 = vld [vmem:[#allocation7 + $0x84] sm:$0xf]
        %v383 = vld [vmem:[#allocation7 + $0x88] sm:$0xf]
        %v384 = vld [vmem:[#allocation7 + $0x8c] sm:$0xf]
        %v385 = vld [vmem:[#allocation7 + $0x90] sm:$0xf]
        %v386 = vld [vmem:[#allocation7 + $0x94] sm:$0xf]
        %v387 = vld [vmem:[#allocation7 + $0x98] sm:$0xf]
        %v388 = vld [vmem:[#allocation7 + $0x9c] sm:$0xf]
        %v389 = vld [vmem:[#allocation7 + $0xa0] sm:$0xf]
        %v390 = vld [vmem:[#allocation7 + $0xa4] sm:$0xf]
        %v391 = vld [vmem:[#allocation7 + $0xa8] sm:$0xf]
        %v392 = vld [vmem:[#allocation7 + $0xac] sm:$0xf]
        %v393 = vld [vmem:[#allocation7 + $0xb0] sm:$0xf]
        %v394 = vld [vmem:[#allocation7 + $0xb4] sm:$0xf]
        %v395 = vld [vmem:[#allocation7 + $0xb8] sm:$0xf]
        %v396 = vld [vmem:[#allocation7 + $0xbc] sm:$0xf]
        %v401 = vunpack.c.l.b16 %v345
        %v402 = vunpack.c.h.b16 %v345
        %v403 = vunpack.c.l.b16 %v346
        %v404 = vunpack.c.l.b16 %v347
        %v405 = vunpack.c.h.b16 %v347
        %v406 = vunpack.c.l.b16 %v348
        %v407 = vpack.c.b16 %v404, %v401
        %v408 = vpack.c.b16 %v405, %v402
        %v409 = vpack.c.b16 %v406, %v403
        %v461 = vunpack.c.l.b16 %v349
        %v462 = vunpack.c.l.b16 %v350
        %v463 = vunpack.c.l.b16 %v351
        %v464 = vunpack.c.l.b16 %v352
        %v465 = vunpack.c.l.b16 %v353
        %v466 = vunpack.c.l.b16 %v354
        %v467 = vunpack.c.l.b16 %v355
        %v468 = vunpack.c.l.b16 %v356
        %v469 = vunpack.c.l.b16 %v357
        %v470 = vunpack.c.l.b16 %v358
        %v471 = vunpack.c.l.b16 %v359
        %v472 = vunpack.c.l.b16 %v360
        %v473 = vunpack.c.l.b16 %v361
        %v474 = vunpack.c.l.b16 %v362
        %v475 = vunpack.c.l.b16 %v363
        %v476 = vunpack.c.l.b16 %v364
        %v477 = vunpack.c.l.b16 %v365
        %v478 = vunpack.c.l.b16 %v366
        %v479 = vunpack.c.l.b16 %v367
        %v480 = vunpack.c.l.b16 %v368
        %v481 = vunpack.c.l.b16 %v369
        %v482 = vunpack.c.l.b16 %v370
        %v483 = vunpack.c.l.b16 %v371
        %v484 = vunpack.c.l.b16 %v372
        %v485 = vunpack.c.l.b16 %v373
        %v486 = vunpack.c.l.b16 %v374
        %v487 = vunpack.c.l.b16 %v375
        %v488 = vunpack.c.l.b16 %v376
        %v489 = vunpack.c.l.b16 %v377
        %v490 = vunpack.c.l.b16 %v378
        %v491 = vunpack.c.l.b16 %v379
        %v492 = vunpack.c.l.b16 %v380
        %v493 = vunpack.c.l.b16 %v381
        %v494 = vunpack.c.l.b16 %v382
        %v495 = vunpack.c.l.b16 %v383
        %v496 = vunpack.c.l.b16 %v384
        %v497 = vunpack.c.l.b16 %v385
        %v498 = vunpack.c.l.b16 %v386
        %v499 = vunpack.c.l.b16 %v387
        %v500 = vunpack.c.l.b16 %v388
        %v501 = vunpack.c.l.b16 %v389
        %v502 = vunpack.c.l.b16 %v390
        %v503 = vunpack.c.l.b16 %v391
        %v504 = vunpack.c.l.b16 %v392
        %v505 = vunpack.c.l.b16 %v393
        %v506 = vunpack.c.l.b16 %v394
        %v507 = vunpack.c.l.b16 %v395
        %v508 = vunpack.c.l.b16 %v396
        %v509 = vpack.c.b16 %v462, %v461
        %v510 = vpack.c.b16 %v464, %v463
        %v511 = vpack.c.b16 %v466, %v465
        %v512 = vpack.c.b16 %v468, %v467
        %v513 = vpack.c.b16 %v470, %v469
        %v514 = vpack.c.b16 %v472, %v471
        %v515 = vpack.c.b16 %v474, %v473
        %v516 = vpack.c.b16 %v476, %v475
        %v517 = vpack.c.b16 %v478, %v477
        %v518 = vpack.c.b16 %v480, %v479
        %v519 = vpack.c.b16 %v482, %v481
        %v520 = vpack.c.b16 %v484, %v483
        %v521 = vpack.c.b16 %v486, %v485
        %v522 = vpack.c.b16 %v488, %v487
        %v523 = vpack.c.b16 %v490, %v489
        %v524 = vpack.c.b16 %v492, %v491
        %v525 = vpack.c.b16 %v494, %v493
        %v526 = vpack.c.b16 %v496, %v495
        %v527 = vpack.c.b16 %v498, %v497
        %v528 = vpack.c.b16 %v500, %v499
        %v529 = vpack.c.b16 %v502, %v501
        %v530 = vpack.c.b16 %v504, %v503
        %v531 = vpack.c.b16 %v506, %v505
        %v532 = vpack.c.b16 %v508, %v507
        %557 = vmatpush.bf16.msra.mxu0 %v516
        %558 = vmatpush.bf16.msra.mxu0 %v515
        %559 = vmatpush.bf16.msra.mxu0 %v514
        %560 = vmatpush.bf16.msra.mxu0 %v513
        %561 = vmatpush.bf16.msra.mxu0 %v512
        %562 = vmatpush.bf16.msra.mxu0 %v511
        %563 = vmatpush.bf16.msra.mxu0 %v510
        %564 = vmatpush.bf16.msra.mxu0 %v509
        %565 = vmatmul.bf16.gmra.mxu0 %v407
        %v566 = vpop.f32.mrf.mxu0
        %v567 = vadd.f32 0.0, %v566
        %v568 = vpop.f32.mrf.mxu0
        %v569 = vadd.f32 0.0, %v568
        %570 = vdwg.mxu0
        %571 = vmatpush.bf16.msra.mxu0 %v524
        %572 = vmatpush.bf16.msra.mxu0 %v523
        %573 = vmatpush.bf16.msra.mxu0 %v522
        %574 = vmatpush.bf16.msra.mxu0 %v521
        %575 = vmatpush.bf16.msra.mxu0 %v520
        %576 = vmatpush.bf16.msra.mxu0 %v519
        %577 = vmatpush.bf16.msra.mxu0 %v518
        %578 = vmatpush.bf16.msra.mxu0 %v517
        %579 = vmatmul.bf16.gmra.mxu0 %v408
        %v580 = vpop.f32.mrf.mxu0
        %v581 = vadd.f32 %v567, %v580
        %v582 = vpop.f32.mrf.mxu0
        %v583 = vadd.f32 %v569, %v582
        %584 = vdwg.mxu0
        %585 = vmatpush.bf16.msra.mxu0 %v532
        %586 = vmatpush.bf16.msra.mxu0 %v531
        %587 = vmatpush.bf16.msra.mxu0 %v530
        %588 = vmatpush.bf16.msra.mxu0 %v529
        %589 = vmatpush.bf16.msra.mxu0 %v528
        %590 = vmatpush.bf16.msra.mxu0 %v527
        %591 = vmatpush.bf16.msra.mxu0 %v526
        %592 = vmatpush.bf16.msra.mxu0 %v525
        %593 = vmatmul.bf16.gmra.mxu0 %v409
        %v594 = vpop.f32.mrf.mxu0
        %v595 = vadd.f32 %v581, %v594
        %v596 = vpop.f32.mrf.mxu0
        %v597 = vadd.f32 %v583, %v596
        %598 = vdwg.mxu0
        %v599 = vld [vmem:[%s2] sm:$0x1]
        %v601 = vperm.slane %v599, 0
        %vm603 = vcmp.ge.f32.partialorder %v595, %v601
        %vm604 = vcmp.ge.f32.partialorder %v597, %v601
        %v605 = vsel %vm603, 1, 0
        %v606 = vsel %vm604, 1, 0
        %v607 = vcvt.s32.f32 %v605
        %v608 = vcvt.s32.f32 %v606
        %v609 = vpack.c.bf16 %v607, %v607
        %v610 = vpack.c.bf16 %v608, %v608
        %v611 = vld [vmem:[#allocation3] sm:$0x1]
        %v612 = vsel %vm287, 0, %v611
        %613 = vst [vmem:[#allocation3] sm:$0x1] %v612
        %v615 = vshrl.u32 %v609, 16
        %v617 = vrot.slane %v615, 7
        %v618 = vshll.u32 %v609, 16
        %v620 = vor.u32 %v617, %v618
        %v621 = vrot.slane %v617, 4
        %v623 = vshrl.u32 %v610, 16
        %v625 = vrot.slane %v623, 7
        %v626 = vshll.u32 %v610, 16
        %v628 = vor.u32 %v625, %v626
        %v629 = vsel %vm292, %v621, %v628
        %v632 = vld [vmem:[#allocation3] sm:$0xf]
        %v633 = vsel %vm313, %v620, %v632
        %634 = vst [vmem:[#allocation3] sm:$0xf] %v633
        %635 = vst [vmem:[#allocation3 + $0xc] sm:$0xf] %v629
        %636 = vst [vmem:[#allocation3 + $0x4] sm:$0xf] %v609
        %637 = vst [vmem:[#allocation3 + $0x10] sm:$0xf] %v610
        %v638 = vrot.slane %v615, 4
        %v639 = vrot.slane %v618, 5
        %v640 = vor.u32 %v638, %v639
        %v641 = vrot.slane %v640, 4
        %v642 = vrot.slane %v626, 5
        %v643 = vsel %vm322, %v641, %v642
        %v644 = vrot.slane %v623, 4
        %v645 = vor.u32 %v644, %v642
        %v646 = vrot.slane %v645, 4
        %649 = vst [vmem:[#allocation3 + $0x8] sm:$0xf] %v643
        %v650 = vld [vmem:[#allocation3 + $0x14] sm:$0xf]
        %v651 = vsel %vm335, %v646, %v650
        %652 = vst [vmem:[#allocation3 + $0x14] sm:$0xf] %v651
        %v653 = vld [vmem:[#allocation3 + $0x14] sm:$0x8]
        %v654 = vsel %vm341, 0, %v653
        %655 = vst [vmem:[#allocation3 + $0x14] sm:$0x8] %v654
        %v656 = vld [vmem:[#allocation3] sm:$0xff]
        %v657 = vld [vmem:[#allocation3 + $0x8] sm:$0xf]
        %v658 = vld [vmem:[#allocation3 + $0xc] sm:$0xff]
        %v659 = vld [vmem:[#allocation3 + $0x14] sm:$0xf]
        %v660 = vld [vmem:[#allocation9] sm:$0xf]
        %v661 = vld [vmem:[#allocation9 + $0x4] sm:$0xf]
        %v662 = vld [vmem:[#allocation9 + $0x8] sm:$0xf]
        %v663 = vld [vmem:[#allocation9 + $0xc] sm:$0xf]
        %v664 = vld [vmem:[#allocation9 + $0x10] sm:$0xf]
        %v665 = vld [vmem:[#allocation9 + $0x14] sm:$0xf]
        %v666 = vld [vmem:[#allocation9 + $0x18] sm:$0xf]
        %v667 = vld [vmem:[#allocation9 + $0x1c] sm:$0xf]
        %v668 = vld [vmem:[#allocation9 + $0x20] sm:$0xf]
        %v669 = vld [vmem:[#allocation9 + $0x24] sm:$0xf]
        %v670 = vld [vmem:[#allocation9 + $0x28] sm:$0xf]
        %v671 = vld [vmem:[#allocation9 + $0x2c] sm:$0xf]
        %v672 = vld [vmem:[#allocation9 + $0x30] sm:$0xf]
        %v673 = vld [vmem:[#allocation9 + $0x34] sm:$0xf]
        %v674 = vld [vmem:[#allocation9 + $0x38] sm:$0xf]
        %v675 = vld [vmem:[#allocation9 + $0x3c] sm:$0xf]
        %v676 = vld [vmem:[#allocation9 + $0x40] sm:$0xf]
        %v677 = vld [vmem:[#allocation9 + $0x44] sm:$0xf]
        %v678 = vld [vmem:[#allocation9 + $0x48] sm:$0xf]
        %v679 = vld [vmem:[#allocation9 + $0x4c] sm:$0xf]
        %v680 = vld [vmem:[#allocation9 + $0x50] sm:$0xf]
        %v681 = vld [vmem:[#allocation9 + $0x54] sm:$0xf]
        %v682 = vld [vmem:[#allocation9 + $0x58] sm:$0xf]
        %v683 = vld [vmem:[#allocation9 + $0x5c] sm:$0xf]
        %v684 = vld [vmem:[#allocation9 + $0x60] sm:$0xf]
        %v685 = vld [vmem:[#allocation9 + $0x64] sm:$0xf]
        %v686 = vld [vmem:[#allocation9 + $0x68] sm:$0xf]
        %v687 = vld [vmem:[#allocation9 + $0x6c] sm:$0xf]
        %v688 = vld [vmem:[#allocation9 + $0x70] sm:$0xf]
        %v689 = vld [vmem:[#allocation9 + $0x74] sm:$0xf]
        %v690 = vld [vmem:[#allocation9 + $0x78] sm:$0xf]
        %v691 = vld [vmem:[#allocation9 + $0x7c] sm:$0xf]
        %v692 = vld [vmem:[#allocation9 + $0x80] sm:$0xf]
        %v693 = vld [vmem:[#allocation9 + $0x84] sm:$0xf]
        %v694 = vld [vmem:[#allocation9 + $0x88] sm:$0xf]
        %v695 = vld [vmem:[#allocation9 + $0x8c] sm:$0xf]
        %v696 = vld [vmem:[#allocation9 + $0x90] sm:$0xf]
        %v697 = vld [vmem:[#allocation9 + $0x94] sm:$0xf]
        %v698 = vld [vmem:[#allocation9 + $0x98] sm:$0xf]
        %v699 = vld [vmem:[#allocation9 + $0x9c] sm:$0xf]
        %v700 = vld [vmem:[#allocation9 + $0xa0] sm:$0xf]
        %v701 = vld [vmem:[#allocation9 + $0xa4] sm:$0xf]
        %v702 = vld [vmem:[#allocation9 + $0xa8] sm:$0xf]
        %v703 = vld [vmem:[#allocation9 + $0xac] sm:$0xf]
        %v704 = vld [vmem:[#allocation9 + $0xb0] sm:$0xf]
        %v705 = vld [vmem:[#allocation9 + $0xb4] sm:$0xf]
        %v706 = vld [vmem:[#allocation9 + $0xb8] sm:$0xf]
        %v707 = vld [vmem:[#allocation9 + $0xbc] sm:$0xf]
        %v712 = vunpack.c.l.b16 %v656
        %v713 = vunpack.c.h.b16 %v656
        %v714 = vunpack.c.l.b16 %v657
        %v715 = vunpack.c.l.b16 %v658
        %v716 = vunpack.c.h.b16 %v658
        %v717 = vunpack.c.l.b16 %v659
        %v718 = vpack.c.b16 %v715, %v712
        %v719 = vpack.c.b16 %v716, %v713
        %v720 = vpack.c.b16 %v717, %v714
        %v772 = vunpack.c.l.b16 %v660
        %v773 = vunpack.c.l.b16 %v661
        %v774 = vunpack.c.l.b16 %v662
        %v775 = vunpack.c.l.b16 %v663
        %v776 = vunpack.c.l.b16 %v664
        %v777 = vunpack.c.l.b16 %v665
        %v778 = vunpack.c.l.b16 %v666
        %v779 = vunpack.c.l.b16 %v667
        %v780 = vunpack.c.l.b16 %v668
        %v781 = vunpack.c.l.b16 %v669
        %v782 = vunpack.c.l.b16 %v670
        %v783 = vunpack.c.l.b16 %v671
        %v784 = vunpack.c.l.b16 %v672
        %v785 = vunpack.c.l.b16 %v673
        %v786 = vunpack.c.l.b16 %v674
        %v787 = vunpack.c.l.b16 %v675
        %v788 = vunpack.c.l.b16 %v676
        %v789 = vunpack.c.l.b16 %v677
        %v790 = vunpack.c.l.b16 %v678
        %v791 = vunpack.c.l.b16 %v679
        %v792 = vunpack.c.l.b16 %v680
        %v793 = vunpack.c.l.b16 %v681
        %v794 = vunpack.c.l.b16 %v682
        %v795 = vunpack.c.l.b16 %v683
        %v796 = vunpack.c.l.b16 %v684
        %v797 = vunpack.c.l.b16 %v685
        %v798 = vunpack.c.l.b16 %v686
        %v799 = vunpack.c.l.b16 %v687
        %v800 = vunpack.c.l.b16 %v688
        %v801 = vunpack.c.l.b16 %v689
        %v802 = vunpack.c.l.b16 %v690
        %v803 = vunpack.c.l.b16 %v691
        %v804 = vunpack.c.l.b16 %v692
        %v805 = vunpack.c.l.b16 %v693
        %v806 = vunpack.c.l.b16 %v694
        %v807 = vunpack.c.l.b16 %v695
        %v808 = vunpack.c.l.b16 %v696
        %v809 = vunpack.c.l.b16 %v697
        %v810 = vunpack.c.l.b16 %v698
        %v811 = vunpack.c.l.b16 %v699
        %v812 = vunpack.c.l.b16 %v700
        %v813 = vunpack.c.l.b16 %v701
        %v814 = vunpack.c.l.b16 %v702
        %v815 = vunpack.c.l.b16 %v703
        %v816 = vunpack.c.l.b16 %v704
        %v817 = vunpack.c.l.b16 %v705
        %v818 = vunpack.c.l.b16 %v706
        %v819 = vunpack.c.l.b16 %v707
        %v820 = vpack.c.b16 %v773, %v772
        %v821 = vpack.c.b16 %v775, %v774
        %v822 = vpack.c.b16 %v777, %v776
        %v823 = vpack.c.b16 %v779, %v778
        %v824 = vpack.c.b16 %v781, %v780
        %v825 = vpack.c.b16 %v783, %v782
        %v826 = vpack.c.b16 %v785, %v784
        %v827 = vpack.c.b16 %v787, %v786
        %v828 = vpack.c.b16 %v789, %v788
        %v829 = vpack.c.b16 %v791, %v790
        %v830 = vpack.c.b16 %v793, %v792
        %v831 = vpack.c.b16 %v795, %v794
        %v832 = vpack.c.b16 %v797, %v796
        %v833 = vpack.c.b16 %v799, %v798
        %v834 = vpack.c.b16 %v801, %v800
        %v835 = vpack.c.b16 %v803, %v802
        %v836 = vpack.c.b16 %v805, %v804
        %v837 = vpack.c.b16 %v807, %v806
        %v838 = vpack.c.b16 %v809, %v808
        %v839 = vpack.c.b16 %v811, %v810
        %v840 = vpack.c.b16 %v813, %v812
        %v841 = vpack.c.b16 %v815, %v814
        %v842 = vpack.c.b16 %v817, %v816
        %v843 = vpack.c.b16 %v819, %v818
        %868 = vmatpush.bf16.msra.mxu0 %v827
        %869 = vmatpush.bf16.msra.mxu0 %v826
        %870 = vmatpush.bf16.msra.mxu0 %v825
        %871 = vmatpush.bf16.msra.mxu0 %v824
        %872 = vmatpush.bf16.msra.mxu0 %v823
        %873 = vmatpush.bf16.msra.mxu0 %v822
        %874 = vmatpush.bf16.msra.mxu0 %v821
        %875 = vmatpush.bf16.msra.mxu0 %v820
        %876 = vmatmul.bf16.gmra.mxu0 %v718
        %v877 = vpop.f32.mrf.mxu0
        %v878 = vadd.f32 0.0, %v877
        %v879 = vpop.f32.mrf.mxu0
        %v880 = vadd.f32 0.0, %v879
        %881 = vdwg.mxu0
        %882 = vmatpush.bf16.msra.mxu0 %v835
        %883 = vmatpush.bf16.msra.mxu0 %v834
        %884 = vmatpush.bf16.msra.mxu0 %v833
        %885 = vmatpush.bf16.msra.mxu0 %v832
        %886 = vmatpush.bf16.msra.mxu0 %v831
        %887 = vmatpush.bf16.msra.mxu0 %v830
        %888 = vmatpush.bf16.msra.mxu0 %v829
        %889 = vmatpush.bf16.msra.mxu0 %v828
        %890 = vmatmul.bf16.gmra.mxu0 %v719
        %v891 = vpop.f32.mrf.mxu0
        %v892 = vadd.f32 %v878, %v891
        %v893 = vpop.f32.mrf.mxu0
        %v894 = vadd.f32 %v880, %v893
        %895 = vdwg.mxu0
        %896 = vmatpush.bf16.msra.mxu0 %v843
        %897 = vmatpush.bf16.msra.mxu0 %v842
        %898 = vmatpush.bf16.msra.mxu0 %v841
        %899 = vmatpush.bf16.msra.mxu0 %v840
        %900 = vmatpush.bf16.msra.mxu0 %v839
        %901 = vmatpush.bf16.msra.mxu0 %v838
        %902 = vmatpush.bf16.msra.mxu0 %v837
        %903 = vmatpush.bf16.msra.mxu0 %v836
        %904 = vmatmul.bf16.gmra.mxu0 %v720
        %v905 = vpop.f32.mrf.mxu0
        %v906 = vadd.f32 %v892, %v905
        %v907 = vpop.f32.mrf.mxu0
        %v908 = vadd.f32 %v894, %v907
        %909 = vdwg.mxu0
        %v910 = vld [vmem:[%s4] sm:$0x1]
        %v912 = vperm.slane %v910, 0
        %vm914 = vcmp.ge.f32.partialorder %v906, %v912
        %vm915 = vcmp.ge.f32.partialorder %v908, %v912
        %v916 = vsel %vm914, 1, 0
        %v917 = vsel %vm915, 1, 0
        %v918 = vcvt.s32.f32 %v916
        %v919 = vcvt.s32.f32 %v917
        %v920 = vadd.f32 %v918, %v281
        %v921 = vadd.f32 %v919, %v282
        %922 = vst [vmem:[%s277] sm:$0xff] %v920
        %923 = vst [vmem:[%s277 + $0x8] sm:$0xff] %v921
        %s924 = sand.u32 %s141, 1
        %s925 = scalar_lea.sflag [#allocation6], %s924
        %s926 = sand.u32 %s141, 1
        %s927 = smul.addr %s926, 16
        %s928 = scalar_lea.vmem [#allocation10], %s927
        // Predicated region
        $region53: #{tpu_custom_call.1} parent=39 // pred_check
          %p929 = pneg %p151
        $region54: #{tpu_custom_call.1} parent=39 // pred_check_branch
          %931 = sbr.rel (%p929) target = $region56
        $region55: #{tpu_custom_call.1} parent=39 // pred_region
          %s932 = smul.u32 2, %s23
          %934 = vsyncadd %s925, 0
          %s935 = smul.addr %s932, 8
          %s936 = scalar_lea.hbm %s5, %s935
          %s937 = sshll.u32 %s928, 4
          %s938 = int_to_ptr.vmem [resolvable:$true] %s937
          %s939 = sshll.u32 %s936, 4
          %s940 = int_to_ptr.hbm [resolvable:$true] %s939
          %945 = dma.vmem_to_hbm [thread:$0]  %s938, 256, %s940, %s925, 128, 128, 8
        $region56: #{tpu_custom_call.1} parent=39 // pred_fallthru
          _
      $region40: #{tpu_custom_call.1} parent=5 // pred_fallthru
        _
      %p946 = scmp.le.s32.totalorder 2, %s18
      // Predicated region
      $region57: #{tpu_custom_call.1} parent=5 // pred_check
        %p947 = pneg %p946
      $region58: #{tpu_custom_call.1} parent=5 // pred_check_branch
        %949 = sbr.rel (%p947) target = $region60
      $region59: #{tpu_custom_call.1} parent=5 // pred_region
        %s950 = ssub.s32 %s18, 2
        // Predicated region
        $region61: #{tpu_custom_call.1} parent=59 // pred_check
          %p951 = pneg %p157
        $region62: #{tpu_custom_call.1} parent=59 // pred_check_branch
          %953 = sbr.rel (%p951) target = $region64
        $region63: #{tpu_custom_call.1} parent=59 // pred_region
          %s954 = sand.u32 %s142, 1
          %s955 = scalar_lea.sflag [#allocation6], %s954
          %s956 = sand.u32 %s142, 1
          %s957 = smul.addr %s956, 16
          %s958 = scalar_lea.vmem [#allocation10], %s957
          %960 = dma.done %s955, 256
        $region64: #{tpu_custom_call.1} parent=59 // pred_fallthru
          _
      $region60: #{tpu_custom_call.1} parent=5 // pred_fallthru
        _
    $region6: #{tpu_custom_call.1} parent=1 // loop_footer
      %s22 = sadd.s32 1, %s18
    $region7: #{tpu_custom_call.1} parent=1 // loop_footer_branch
      %17 = sbr.rel target = $region3
    $region8: #{tpu_custom_call.1} parent=1 // loop_exit
      _
    %961 = vsyncpa [#allocation5], 1
    %s962 = scalar_lea.sflag [#allocation5], 1
    %963 = vsyncpa %s962, 1
    %964 = vsyncpa [#allocation8], 1
    %965 = vsyncpa [#allocation6], 1
    %s966 = scalar_lea.sflag [#allocation6], 1
    %967 = vsyncpa %s966, 1

</llo_original>
